<compile_context>
chip_gen: v7x
topology: tpu7x:2x2x1
jax: 0.10.0
libtpu: 0.0.40
codegen_flags: <defaults>
</compile_context>

<pallas_src>
import functools
import math

import jax
import jax.numpy as jnp
from jax.experimental import pallas as pl
from jax.experimental.pallas import tpu as pltpu


_LANE = 128


# ----------------------------------------------------------------------------
# Pallas kernels (pure elementwise; params are (1, C) blocks broadcast over rows)
# The activation tile is cast to the output dtype *inside* the kernel (VPU has
# slack; avoids a separate XLA cast pass over HBM).
# ----------------------------------------------------------------------------
def _mul_add_kernel(x_ref, w_ref, b_ref, o_ref):
    x = x_ref[...].astype(o_ref.dtype)
    o_ref[...] = x * w_ref[...] + b_ref[...]


def _mul_kernel(x_ref, w_ref, o_ref):
    o_ref[...] = x_ref[...].astype(o_ref.dtype) * w_ref[...]


def _add_kernel(x_ref, b_ref, o_ref):
    o_ref[...] = x_ref[...].astype(o_ref.dtype) + b_ref[...]


# ----------------------------------------------------------------------------
# Layout planning helpers (all static Python; jit-safe)
# ----------------------------------------------------------------------------
def _round_up(a, b):
    return -(-a // b) * b


def _fold_factor(rows, size):
    """Fold G consecutive rows into the lane axis so the folded width is a
    multiple of 128 (lane-dense stores). Returns 1 when no legal fold exists."""
    if size % _LANE == 0:
        return 1
    best = 1
    g = 1
    while g * size <= 1024:
        if rows % g == 0 and (g * size) % _LANE == 0:
            best = g
        g += 1
    return best


@functools.lru_cache(maxsize=None)
def _vmem_limit_bytes():
    """Generation-aware scoped-VMEM limit: half of physical VMEM, capped at
    64 MiB (safe on v5e/v6e 128 MiB and on v7x 64 MiB per TensorCore)."""
    cap = 64 << 20
    try:
        info = pltpu.get_tpu_info()
        cap = int(getattr(info, "vmem_capacity_bytes", cap)) or cap
    except Exception:
        pass
    return min(64 << 20, max(16 << 20, cap // 2))


def _largest_lane_divisor(cols, max_c):
    """Largest multiple of 128 <= max_c that divides cols; fall back to the
    largest multiple of 128 <= max_c (partial lane-edge block)."""
    c = (max_c // _LANE) * _LANE
    fallback = c
    while c >= _LANE:
        if cols % c == 0:
            return c
        c -= _LANE
    return fallback


# ----------------------------------------------------------------------------
# Wrapper
# ----------------------------------------------------------------------------
def elementwise_linear(x, weight=None, bias=None, inplace=False):
    """y = x * weight + bias with (size,) params broadcast over leading dims."""
    if weight is None and bias is None:
        return x

    orig_shape = x.shape
    size = orig_shape[-1]
    rows = math.prod(orig_shape[:-1]) if len(orig_shape) > 1 else 1

    dtypes = [x.dtype] + [p.dtype for p in (weight, bias) if p is not None]
    out_dtype = jnp.result_type(*dtypes)
    x_item = jnp.dtype(x.dtype).itemsize
    out_item = jnp.dtype(out_dtype).itemsize
    bytes_per_elem = x_item + out_item
    # Packed-sublane multiple of the narrowest dtype (8 f32 / 16 bf16 / 32 i8).
    pack = max(8, 32 // max(1, min(x_item, out_item, 4)))

    # --- lane-dense folding: (rows, size) -> (rows//g, g*size) -------------
    g = _fold_factor(rows, size)
    rows_f = rows // g
    cols = size * g
    x2 = x.reshape(rows_f, cols)                 # no dtype cast here (view-ish)

    # --- generation-aware tile budget ---------------------------------------
    vmem_limit = _vmem_limit_bytes()
    budget_bytes = min(16 << 20, vmem_limit // 3)        # x-tile + out-tile, single buffer
    budget_elems = max(budget_bytes // bytes_per_elem, pack * _LANE)

    # --- robustness fallback: huge lane-sparse feature dim ------------------
    # If the last dim is not a multiple of 128, the lane tile must span it
    # fully; if even a minimum-height tile would blow the budget, pad to 128.
    pad_c = 0
    if cols % _LANE != 0:
        min_tile_bytes = min(pack, rows_f) * cols * bytes_per_elem
        if min_tile_bytes > budget_bytes:
            pad_c = _round_up(cols, _LANE) - cols
            x2 = jnp.pad(x2, ((0, 0), (0, pad_c)))
    cols_p = cols + pad_c

    # --- lane-axis tile ------------------------------------------------------
    if cols_p % _LANE == 0:
        max_c = max(_LANE, min(cols_p, (budget_elems // pack) // _LANE * _LANE))
        tile_c = cols_p if cols_p <= max_c else _largest_lane_divisor(cols_p, max_c)
    else:
        tile_c = cols_p                           # full last dim (always legal)

    # --- sublane-axis tile ---------------------------------------------------
    tile_r = max(pack, (budget_elems // tile_c) // pack * pack)
    if rows_f <= tile_r:
        tile_r = rows_f                           # full dim is always legal

    # --- v7x megacore: sizeable problems need >= 2 blocks on a parallel axis
    n_r, n_c = pl.cdiv(rows_f, tile_r), pl.cdiv(cols_p, tile_c)
    if (n_r * n_c == 1 and rows_f >= 2 * pack
            and rows_f * cols_p * x_item >= (4 << 20)):
        tile_r = _round_up(pl.cdiv(rows_f, 2), pack)
        n_r = pl.cdiv(rows_f, tile_r)
    grid = (n_r, n_c)

    # --- params: tiled g times to the folded lane width, cast once (tiny) ----
    def _param_row(p):
        row = jnp.tile(p.reshape(1, size).astype(out_dtype), (1, g))
        if pad_c:
            row = jnp.pad(row, ((0, 0), (0, pad_c)))
        return row

    x_spec = pl.BlockSpec((tile_r, tile_c), lambda i, j: (i, j))
    p_spec = pl.BlockSpec((1, tile_c), lambda i, j: (0, j))
    out_spec = pl.BlockSpec((tile_r, tile_c), lambda i, j: (i, j))

    if weight is not None and bias is not None:
        kern, in_specs = _mul_add_kernel, [x_spec, p_spec, p_spec]
        args = (x2, _param_row(weight), _param_row(bias))
    elif weight is not None:
        kern, in_specs = _mul_kernel, [x_spec, p_spec]
        args = (x2, _param_row(weight))
    else:
        kern, in_specs = _add_kernel, [x_spec, p_spec]
        args = (x2, _param_row(bias))

    # Honor torch's inplace=True intent: let XLA alias/donate x's HBM buffer.
    aliases = {0: 0} if (inplace and x2.dtype == out_dtype) else {}

    y = pl.pallas_call(
        kern,
        out_shape=jax.ShapeDtypeStruct((rows_f, cols_p), out_dtype),
        grid=grid,
        in_specs=in_specs,
        out_specs=out_spec,
        input_output_aliases=aliases,
        compiler_params=pltpu.CompilerParams(
            dimension_semantics=("parallel", "parallel"),
            vmem_limit_bytes=vmem_limit),
    )(*args)

    if pad_c:
        y = y[:, :cols]
    return y.reshape(orig_shape)


class ElementWiseLinear:
    """JAX/Pallas equivalent of the PyTorch module (post reset_parameters())."""

    def __init__(self, size, weight=True, bias=True, inplace=False,
                 dtype=jnp.float32):
        self.weight = jnp.ones((size,), dtype) if weight else None
        self.bias = jnp.zeros((size,), dtype) if bias else None
        # TODO(synk): true in-place mutation has no JAX equivalent; we honor
        # the intent via input_output_aliases (buffer donation), math is identical.
        self.inplace = inplace

    def __call__(self, x):
        return elementwise_linear(x, self.weight, self.bias, inplace=self.inplace)


# ----------------------------------------------------------------------------
if __name__ == "__main__":
    key = jax.random.PRNGKey(0)
    kx, kw, kb, kx2, kw2, kx3, kb3, kx4, kw4, kb4, kx5, kw5 = jax.random.split(key, 12)

    # Small shapes consistent with the module: batch=2, seq=16, size=32.
    B, S, size = 2, 16, 32
    x = jax.random.normal(kx, (B, S, size), jnp.float32)

    # 1) Module exactly as constructed (reset_parameters: weight=1, bias=0).
    mod = ElementWiseLinear(size)
    y = jax.block_until_ready(jax.jit(mod.__call__)(x))
    assert y.shape == x.shape
    assert jnp.allclose(y, x, atol=1e-6)

    # 2) Non-trivial weight AND bias (fused mul+add kernel).
    w = jax.random.normal(kw, (size,), jnp.float32)
    b = jax.random.normal(kb, (size,), jnp.float32)
    y2 = jax.block_until_ready(
        jax.jit(lambda a, ww, bb: elementwise_linear(a, ww, bb))(x, w, b))
    assert jnp.allclose(y2, x * w + b, rtol=1e-5, atol=1e-5)

    # 3) Weight-only, larger row count.
    x_big = jax.random.normal(kx2, (2500, 256), jnp.float32)
    w_big = jax.random.normal(kw2, (256,), jnp.float32)
    y3 = jax.block_until_ready(
        jax.jit(lambda a, p: elementwise_linear(a, weight=p))(x_big, w_big))
    assert jnp.allclose(y3, x_big * w_big, rtol=1e-5, atol=1e-5)

    # 4) Bias-only on an awkward small shape (no legal lane fold -> full block).
    x_odd = jax.random.normal(kx3, (7, 5), jnp.float32)
    b_odd = jax.random.normal(kb3, (5,), jnp.float32)
    y4 = jax.block_until_ready(
        jax.jit(lambda a, p: elementwise_linear(a, bias=p))(x_odd, b_odd))
    assert jnp.allclose(y4, x_odd + b_odd, rtol=1e-5, atol=1e-5)

    # 5) Mixed dtypes: bf16 activations, f32 params -> in-kernel cast path.
    x_bf = jax.random.normal(kx4, (64, 256), jnp.float32).astype(jnp.bfloat16)
    w_f = jax.random.normal(kw4, (256,), jnp.float32)
    b_f = jax.random.normal(kb4, (256,), jnp.float32)
    y5 = jax.block_until_ready(
        jax.jit(lambda a, ww, bb: elementwise_linear(a, ww, bb))(x_bf, w_f, b_f))
    ref5 = x_bf.astype(jnp.float32) * w_f + b_f
    assert y5.dtype == jnp.float32
    assert jnp.allclose(y5, ref5, rtol=1e-5, atol=1e-5)

    # 6) Inplace-intent path (aliasing) + megacore row-split on a 8 MiB tensor.
    x_med = jax.random.normal(kx5, (4096, 512), jnp.float32)
    w_med = jax.random.normal(kw5, (512,), jnp.float32)
    y6 = jax.block_until_ready(
        jax.jit(lambda a, p: elementwise_linear(a, weight=p, inplace=True))(
            x_med, w_med))
    assert jnp.allclose(y6, x_med * w_med, rtol=1e-5, atol=1e-5)

    print("KERNEL_OK")
</pallas_src>

<mosaic_0001>
module attributes {stable_mosaic.version = 11 : i64} {
  func.func @_mul_add_kernel(%arg0: i32, %arg1: i32, %arg2: memref<1x1024xf32, #tpu.memory_space<vmem>>, %arg3: memref<1x1024xf32, #tpu.memory_space<vmem>>, %arg4: memref<1x1024xf32, #tpu.memory_space<vmem>>, %arg5: memref<1x1024xf32, #tpu.memory_space<vmem>>) attributes {dimension_semantics = [#tpu.dimension_semantics<parallel>, #tpu.dimension_semantics<parallel>], iteration_bounds = array<i64: 1, 1>, scalar_prefetch = 0 : i64, scratch_operands = 0 : i64, tpu.core_type = #tpu.core_type<tc>, window_params = [{transform_indices = @transform_0, window_bounds = array<i64: 1, 1024>}, {transform_indices = @transform_1, window_bounds = array<i64: 1, 1024>}, {transform_indices = @transform_2, window_bounds = array<i64: 1, 1024>}, {transform_indices = @transform_3, window_bounds = array<i64: 1, 1024>}]} {
    %c0 = arith.constant 0 : index
    %c0_0 = arith.constant 0 : index
    %0 = vector.load %arg2[%c0, %c0_0] : memref<1x1024xf32, #tpu.memory_space<vmem>>, vector<1x1024xf32>
    %c0_1 = arith.constant 0 : index
    %c0_2 = arith.constant 0 : index
    %1 = vector.load %arg3[%c0_1, %c0_2] : memref<1x1024xf32, #tpu.memory_space<vmem>>, vector<1x1024xf32>
    %2 = arith.mulf %0, %1 : vector<1x1024xf32>
    %c0_3 = arith.constant 0 : index
    %c0_4 = arith.constant 0 : index
    %3 = vector.load %arg4[%c0_3, %c0_4] : memref<1x1024xf32, #tpu.memory_space<vmem>>, vector<1x1024xf32>
    %4 = arith.addf %2, %3 : vector<1x1024xf32>
    %c0_5 = arith.constant 0 : index
    %c0_6 = arith.constant 0 : index
    %5 = vector.load %arg5[%c0_5, %c0_6] : memref<1x1024xf32, #tpu.memory_space<vmem>>, vector<1x1024xf32>
    tpu.vector_store %arg5[%c0_5, %c0_6], %4 {strides = array<i32>} : memref<1x1024xf32, #tpu.memory_space<vmem>>, vector<1x1024xf32>,
    return
  }
  func.func @transform_0(%arg0: i32, %arg1: i32) -> (i32, i32) {
    %c0_i32 = arith.constant 0 : i32
    return %arg0, %arg1 : i32, i32
  }
  func.func @transform_1(%arg0: i32, %arg1: i32) -> (i32, i32) {
    %c0_i32 = arith.constant 0 : i32
    %c0_i32_0 = arith.constant 0 : i32
    return %c0_i32, %arg1 : i32, i32
  }
  func.func @transform_2(%arg0: i32, %arg1: i32) -> (i32, i32) {
    %c0_i32 = arith.constant 0 : i32
    %c0_i32_0 = arith.constant 0 : i32
    return %c0_i32, %arg1 : i32, i32
  }
  func.func @transform_3(%arg0: i32, %arg1: i32) -> (i32, i32) {
    %c0_i32 = arith.constant 0 : i32
    return %arg0, %arg1 : i32, i32
  }
}

</mosaic_0001>

<llo_original>
// kernel: tile.2
$region0: #{tile.2}
  #allocation0 [shape = 's32[1]{0}', space=sflag, size = 0x4, scoped, tag = 'scoped memory for tile.2']
  %s0 = inlined_call_operand.<no memory space> [shape: f32[], index: 0, kind: input, shape index: {}]
  %s1 = inlined_call_operand.vmem [shape: f32[1,1024], index: 1, kind: output, shape index: {}]
  %v2 = vstv %s0
  %3 = vst [vmem:[%s1] sm:$0x1] %v2
  %s4 = scalar_lea.vmem %s1, 1
  %5 = vst [vmem:[%s4] sm:$0x1] %v2
  %s6 = scalar_lea.vmem %s1, 2
  %7 = vst [vmem:[%s6] sm:$0x1] %v2
  %s8 = scalar_lea.vmem %s1, 3
  %9 = vst [vmem:[%s8] sm:$0x1] %v2
  %s10 = scalar_lea.vmem %s1, 4
  %11 = vst [vmem:[%s10] sm:$0x1] %v2
  %s12 = scalar_lea.vmem %s1, 5
  %13 = vst [vmem:[%s12] sm:$0x1] %v2
  %s14 = scalar_lea.vmem %s1, 6
  %15 = vst [vmem:[%s14] sm:$0x1] %v2
  %s16 = scalar_lea.vmem %s1, 7
  %17 = vst [vmem:[%s16] sm:$0x1] %v2

// kernel: a_call__.1
$region0: #{a_call__.1}
  #allocation0 [shape = 'u32[]', space=smem, size = 0x4, offset = 0x4, fixed_abs, tag = 'smem constant byte address 0x4 - core index']
  #allocation1 [shape = 'u32[144,128]{1,0:T(1,128)}', space=vmem, size = 0x12000, scoped, tag = 'internal scratch']
  %s0 = inlined_call_operand.vmem [shape: f32[1,1024], index: 0, kind: input, shape index: {}]
  %s1 = inlined_call_operand.vmem [shape: f32[1,1024], index: 1, kind: input, shape index: {}]
  %s2 = inlined_call_operand.vmem [shape: f32[1,1024], index: 2, kind: input, shape index: {}]
  %s3 = inlined_call_operand.vmem [shape: f32[1,1024], index: 3, kind: output, shape index: {}]
  %s4 = sld [smem:[#allocation0]]
  $region22: #{a_call__.1} parent=0
    _
  %s6 = ssub.s32 1, %s4
  %s7 = scalar_select 0, %s6, %s4
  // Predicated region
  $region2: #{a_call__.1} parent=0 // pred_check
    _
  $region3: #{a_call__.1} parent=0 // pred_check_branch
    %9 = sbr.rel (0) target = $region5
  $region4: #{a_call__.1} parent=0 // pred_region
    _
  $region5: #{a_call__.1} parent=0 // pred_fallthru
    _
  // Predicated region
  $region6: #{a_call__.1} parent=0 // pred_check
    _
  $region7: #{a_call__.1} parent=0 // pred_check_branch
    %11 = sbr.rel (0) target = $region9
  $region8: #{a_call__.1} parent=0 // pred_region
    _
  $region9: #{a_call__.1} parent=0 // pred_fallthru
    _
  // Predicated region
  $region10: #{a_call__.1} parent=0 // pred_check
    _
  $region11: #{a_call__.1} parent=0 // pred_check_branch
    %13 = sbr.rel (0) target = $region13
  $region12: #{a_call__.1} parent=0 // pred_region
    _
  $region13: #{a_call__.1} parent=0 // pred_fallthru
    _
  %v14 = vld [vmem:[%s0] sm:$0xff]
  %v15 = vld [vmem:[%s1] sm:$0xff]
  %v16 = vmul.f32 %v14, %v15
  %v17 = vld [vmem:[%s2] sm:$0xff]
  %v18 = vadd.f32 %v16, %v17
  %19 = vst [vmem:[%s3] sm:$0xff] %v18
  // Predicated region
  $region14: #{a_call__.1} parent=0 // pred_check
    _
  $region15: #{a_call__.1} parent=0 // pred_check_branch
    %21 = sbr.rel (0) target = $region17
  $region16: #{a_call__.1} parent=0 // pred_region
    _
  $region17: #{a_call__.1} parent=0 // pred_fallthru
    _
  // Predicated region
  $region18: #{a_call__.1} parent=0 // pred_check
    _
  $region19: #{a_call__.1} parent=0 // pred_check_branch
    %23 = sbr.rel (0) target = $region21
  $region20: #{a_call__.1} parent=0 // pred_region
    _
  $region21: #{a_call__.1} parent=0 // pred_fallthru
    _

</llo_original>
